<compile_context>
chip_gen: v7x
topology: tpu7x:2x2x1
jax: 0.10.0
libtpu: 0.0.40
codegen_flags: <defaults>
</compile_context>

<pallas_src>
import jax
import jax.numpy as jnp
from jax.experimental import pallas as pl
from jax.experimental.pallas import tpu as pltpu


def fusion_kernel(x_ref, wenc_ref, wf_ref, slab_ref, out_ref):
    # --- all three encoders in one matmul (block-diagonal weight, bias via ones-column) ---
    enc = jnp.maximum(
        jnp.dot(x_ref[...], wenc_ref[...], preferred_element_type=jnp.float32),
        0.0)

    # --- fusion Linear on concat(t, i, a) (already contiguous in `enc`) + ReLU ---
    bf = slab_ref[0:1, :]                      # (1, H) fusion bias
    fused = jnp.maximum(
        jnp.dot(enc, wf_ref[...], preferred_element_type=jnp.float32) + bf,
        0.0)

    # --- output Linear (N=1): VPU broadcast-mul + cross-lane reduce instead of MXU ---
    wo_row = slab_ref[1:2, :]                  # (1, H) output weight row
    bo = slab_ref[2:3, 0:1]                    # (1, 1) output bias
    out = jnp.sum(fused * wo_row, axis=-1, keepdims=True) + bo
    out_ref[...] = out.astype(out_ref.dtype)


def _round_up(x, m):
    return ((x + m - 1) // m) * m


def fusion_model_forward(text, image, audio, params):
    """text/image/audio: (B, dim) float32.  Returns (B, 1) logits."""
    (wt, bt, wi, bi, wa, ba, wf, bf, wo, bo) = params
    B = text.shape[0]
    Dt, Di, Da = text.shape[1], image.shape[1], audio.shape[1]
    H = wt.shape[1]                       # fusion_output_dim
    K = Dt + Di + Da                      # concatenated input width (96)
    Kp = _round_up(K + 1, 128)            # +1 for the bias ("ones") column, lane aligned

    # ---------- wrapper-side packing (tiny one-time copies, ~25 KB) ----------
    # Augmented input: [ text | image | audio | 1 | 0 ... 0 ]  -> (B, Kp)
    x_aug = jnp.zeros((B, Kp), jnp.float32)
    x_aug = x_aug.at[:, :Dt].set(text)
    x_aug = x_aug.at[:, Dt:Dt + Di].set(image)
    x_aug = x_aug.at[:, Dt + Di:K].set(audio)
    x_aug = x_aug.at[:, K].set(1.0)

    # Block-diagonal encoder weight with encoder biases in the augmented row: (Kp, 3H)
    w_enc = jnp.zeros((Kp, 3 * H), jnp.float32)
    w_enc = w_enc.at[:Dt, 0:H].set(wt)
    w_enc = w_enc.at[Dt:Dt + Di, H:2 * H].set(wi)
    w_enc = w_enc.at[Dt + Di:K, 2 * H:3 * H].set(wa)
    w_enc = w_enc.at[K, 0:H].set(bt)
    w_enc = w_enc.at[K, H:2 * H].set(bi)
    w_enc = w_enc.at[K, 2 * H:3 * H].set(ba)

    # Small slab: row 0 = fusion bias, row 1 = output weight row, [2, 0] = output bias.
    slab = jnp.zeros((3, H), jnp.float32)
    slab = slab.at[0, :].set(bf)
    slab = slab.at[1, :].set(wo[:, 0])
    slab = slab.at[2, 0].set(bo[0])

    flops = 2 * B * (Kp * 3 * H + 3 * H * H + H)
    bytes_accessed = 4 * (x_aug.size + w_enc.size + wf.size + slab.size + B)

    return pl.pallas_call(
        fusion_kernel,
        out_shape=jax.ShapeDtypeStruct((B, 1), jnp.float32),
        # Small shapes: no grid; every operand is a single full-array VMEM block.
        in_specs=[pl.BlockSpec(memory_space=pltpu.MemorySpace.VMEM)] * 4,
        out_specs=pl.BlockSpec(memory_space=pltpu.MemorySpace.VMEM),
        cost_estimate=pl.CostEstimate(
            flops=flops, transcendentals=0, bytes_accessed=bytes_accessed),
    )(x_aug, w_enc, wf, slab)


def init_params(key, text_dim, image_dim, audio_dim, fusion_dim):
    """Deterministic synthetic parameters. Weights stored as (in_dim, out_dim)."""
    ks = jax.random.split(key, 10)

    def linear(kw, kb, in_dim, out_dim):
        # Roughly matches PyTorch's uniform(-1/sqrt(in), 1/sqrt(in)) init.
        bound = 1.0 / jnp.sqrt(jnp.float32(in_dim))
        w = jax.random.uniform(kw, (in_dim, out_dim), jnp.float32, -bound, bound)
        b = jax.random.uniform(kb, (out_dim,), jnp.float32, -bound, bound)
        return w, b

    wt, bt = linear(ks[0], ks[1], text_dim, fusion_dim)
    wi, bi = linear(ks[2], ks[3], image_dim, fusion_dim)
    wa, ba = linear(ks[4], ks[5], audio_dim, fusion_dim)
    wf, bf = linear(ks[6], ks[7], fusion_dim * 3, fusion_dim)
    wo, bo = linear(ks[8], ks[9], fusion_dim, 1)
    return (wt, bt, wi, bi, wa, ba, wf, bf, wo, bo)


def reference_forward(text, image, audio, params):
    (wt, bt, wi, bi, wa, ba, wf, bf, wo, bo) = params
    t = jnp.maximum(text @ wt + bt, 0.0)
    i = jnp.maximum(image @ wi + bi, 0.0)
    a = jnp.maximum(audio @ wa + ba, 0.0)
    fused = jnp.concatenate([t, i, a], axis=1)
    fused = jnp.maximum(fused @ wf + bf, 0.0)
    return fused @ wo + bo


if __name__ == "__main__":
    B = 8
    TEXT_DIM, IMAGE_DIM, AUDIO_DIM, FUSION_DIM = 32, 48, 16, 32

    key = jax.random.PRNGKey(0)
    k_txt, k_img, k_aud, k_par = jax.random.split(key, 4)

    text = jax.random.normal(k_txt, (B, TEXT_DIM), jnp.float32)
    image = jax.random.normal(k_img, (B, IMAGE_DIM), jnp.float32)
    audio = jax.random.normal(k_aud, (B, AUDIO_DIM), jnp.float32)
    params = init_params(k_par, TEXT_DIM, IMAGE_DIM, AUDIO_DIM, FUSION_DIM)

    out = fusion_model_forward(text, image, audio, params)
    out = jax.block_until_ready(out)

    ref = reference_forward(text, image, audio, params)
    assert out.shape == (B, 1)
    assert jnp.allclose(out, ref, atol=1e-5, rtol=1e-5)

    print("KERNEL_OK")
</pallas_src>

<mosaic_0001>
module attributes {stable_mosaic.version = 11 : i64} {
  func.func @fusion_kernel(%arg0: memref<8x128xf32, #tpu.memory_space<vmem>>, %arg1: memref<128x96xf32, #tpu.memory_space<vmem>>, %arg2: memref<96x32xf32, #tpu.memory_space<vmem>>, %arg3: memref<3x32xf32, #tpu.memory_space<vmem>>, %arg4: memref<8x1xf32, #tpu.memory_space<vmem>>) attributes {dimension_semantics = [], scalar_prefetch = 0 : i64, scratch_operands = 0 : i64, tpu.core_type = #tpu.core_type<tc>} {
    %c0 = arith.constant 0 : index
    %c0_0 = arith.constant 0 : index
    %0 = vector.load %arg0[%c0, %c0_0] : memref<8x128xf32, #tpu.memory_space<vmem>>, vector<8x128xf32>
    %c0_1 = arith.constant 0 : index
    %c0_2 = arith.constant 0 : index
    %1 = vector.load %arg1[%c0_1, %c0_2] : memref<128x96xf32, #tpu.memory_space<vmem>>, vector<128x96xf32>
    %cst = arith.constant dense<0.000000e+00> : vector<8x96xf32>
    %2 = tpu.matmul %0, %1, %cst {dimension_numbers = #tpu.dot_dimension_numbers<[1], [0], [0], [1], [0, 0, 1, 1], [], []>} : vector<8x128xf32>, vector<128x96xf32>, vector<8x96xf32> -> vector<8x96xf32>
    %cst_3 = arith.constant 0.000000e+00 : f32
    %3 = vector.broadcast %cst_3 : f32 to vector<8x96xf32>
    %4 = arith.maximumf %2, %3 : vector<8x96xf32>
    %c0_4 = arith.constant 0 : index
    %c0_5 = arith.constant 0 : index
    %5 = vector.load %arg3[%c0_4, %c0_5] : memref<3x32xf32, #tpu.memory_space<vmem>>, vector<1x32xf32>
    %c0_6 = arith.constant 0 : index
    %c0_7 = arith.constant 0 : index
    %6 = vector.load %arg2[%c0_6, %c0_7] : memref<96x32xf32, #tpu.memory_space<vmem>>, vector<96x32xf32>
    %cst_8 = arith.constant dense<0.000000e+00> : vector<8x32xf32>
    %7 = tpu.matmul %4, %6, %cst_8 {dimension_numbers = #tpu.dot_dimension_numbers<[1], [0], [0], [1], [0, 0, 1, 1], [], []>} : vector<8x96xf32>, vector<96x32xf32>, vector<8x32xf32> -> vector<8x32xf32>
    %8 = vector.broadcast %5 : vector<1x32xf32> to vector<8x32xf32>
    %9 = arith.addf %7, %8 : vector<8x32xf32>
    %cst_9 = arith.constant 0.000000e+00 : f32
    %10 = vector.broadcast %cst_9 : f32 to vector<8x32xf32>
    %11 = arith.maximumf %9, %10 : vector<8x32xf32>
    %c1 = arith.constant 1 : index
    %c0_10 = arith.constant 0 : index
    %12 = vector.load %arg3[%c1, %c0_10] : memref<3x32xf32, #tpu.memory_space<vmem>>, vector<1x32xf32>
    %c2 = arith.constant 2 : index
    %c0_11 = arith.constant 0 : index
    %13 = vector.load %arg3[%c2, %c0_11] : memref<3x32xf32, #tpu.memory_space<vmem>>, vector<1x1xf32>
    %14 = vector.broadcast %12 : vector<1x32xf32> to vector<8x32xf32>
    %15 = arith.mulf %11, %14 : vector<8x32xf32>
    %cst_12 = arith.constant dense<0.000000e+00> : vector<8xf32>
    %16 = vector.multi_reduction <add>, %15, %cst_12 [1] : vector<8x32xf32> to vector<8xf32>
    %17 = vector.shape_cast %16 : vector<8xf32> to vector<8x1xf32>
    %18 = vector.broadcast %13 : vector<1x1xf32> to vector<8x1xf32>
    %19 = arith.addf %17, %18 : vector<8x1xf32>
    %c0_13 = arith.constant 0 : index
    %c0_14 = arith.constant 0 : index
    %20 = vector.load %arg4[%c0_13, %c0_14] : memref<8x1xf32, #tpu.memory_space<vmem>>, vector<8x1xf32>
    tpu.vector_store %arg4[%c0_13, %c0_14], %19 {strides = array<i32>} : memref<8x1xf32, #tpu.memory_space<vmem>>, vector<8x1xf32>,
    return
  }
}

</mosaic_0001>

<llo_original>
// kernel: tpu_custom_call.1
$region0: #{tpu_custom_call.1}
  #allocation0 [shape = 'u32[]', space=smem, size = 0x4, offset = 0x4, fixed_abs, tag = 'smem constant byte address 0x4 - core index']
  #allocation1 [shape = 'u32[144,128]{1,0:T(1,128)}', space=vmem, size = 0x12000, scoped, tag = 'internal scratch']
  %s0 = inlined_call_operand.vmem [shape: f32[8,128], index: 0, kind: input, shape index: {}]
  %s1 = inlined_call_operand.vmem [shape: f32[128,96], index: 1, kind: input, shape index: {}]
  %s2 = inlined_call_operand.vmem [shape: f32[96,32], index: 2, kind: input, shape index: {}]
  %s3 = inlined_call_operand.vmem [shape: f32[3,32], index: 3, kind: input, shape index: {}]
  %s4 = inlined_call_operand.vmem [shape: f32[8,1], index: 4, kind: output, shape index: {}]
  %s5 = sld [smem:[#allocation0]]
  $region26: #{tpu_custom_call.1} parent=0
    _
  %s7 = ssub.s32 1, %s5
  %s8 = scalar_select 0, %s7, %s5
  // Predicated region
  $region2: #{tpu_custom_call.1} parent=0 // pred_check
    _
  $region3: #{tpu_custom_call.1} parent=0 // pred_check_branch
    %10 = sbr.rel (0) target = $region5
  $region4: #{tpu_custom_call.1} parent=0 // pred_region
    _
  $region5: #{tpu_custom_call.1} parent=0 // pred_fallthru
    _
  // Predicated region
  $region6: #{tpu_custom_call.1} parent=0 // pred_check
    _
  $region7: #{tpu_custom_call.1} parent=0 // pred_check_branch
    %12 = sbr.rel (0) target = $region9
  $region8: #{tpu_custom_call.1} parent=0 // pred_region
    _
  $region9: #{tpu_custom_call.1} parent=0 // pred_fallthru
    _
  // Predicated region
  $region10: #{tpu_custom_call.1} parent=0 // pred_check
    _
  $region11: #{tpu_custom_call.1} parent=0 // pred_check_branch
    %14 = sbr.rel (0) target = $region13
  $region12: #{tpu_custom_call.1} parent=0 // pred_region
    _
  $region13: #{tpu_custom_call.1} parent=0 // pred_fallthru
    _
  // Predicated region
  $region14: #{tpu_custom_call.1} parent=0 // pred_check
    _
  $region15: #{tpu_custom_call.1} parent=0 // pred_check_branch
    %16 = sbr.rel (0) target = $region17
  $region16: #{tpu_custom_call.1} parent=0 // pred_region
    _
  $region17: #{tpu_custom_call.1} parent=0 // pred_fallthru
    _
  %v17 = vld [vmem:[%s0] sm:$0xff]
  %v18 = vld [vmem:[%s1] sm:$0xff]
  %v19 = vld [vmem:[%s1 + $0x8] sm:$0xff]
  %v20 = vld [vmem:[%s1 + $0x10] sm:$0xff]
  %v21 = vld [vmem:[%s1 + $0x18] sm:$0xff]
  %v22 = vld [vmem:[%s1 + $0x20] sm:$0xff]
  %v23 = vld [vmem:[%s1 + $0x28] sm:$0xff]
  %v24 = vld [vmem:[%s1 + $0x30] sm:$0xff]
  %v25 = vld [vmem:[%s1 + $0x38] sm:$0xff]
  %v26 = vld [vmem:[%s1 + $0x40] sm:$0xff]
  %v27 = vld [vmem:[%s1 + $0x48] sm:$0xff]
  %v28 = vld [vmem:[%s1 + $0x50] sm:$0xff]
  %v29 = vld [vmem:[%s1 + $0x58] sm:$0xff]
  %v30 = vld [vmem:[%s1 + $0x60] sm:$0xff]
  %v31 = vld [vmem:[%s1 + $0x68] sm:$0xff]
  %v32 = vld [vmem:[%s1 + $0x70] sm:$0xff]
  %v33 = vld [vmem:[%s1 + $0x78] sm:$0xff]
  %34 = vmatprep.subr.mxu0 0.0
  %35 = vmatpush1.msra.mxu0 %v18
  %36 = vmatprep.subr.mxu0 0.0
  %37 = vmatpush1.msra.mxu0 %v19
  %38 = vmatprep.subr.mxu0 0.0
  %39 = vmatpush1.msra.mxu0 %v20
  %40 = vmatprep.subr.mxu0 0.0
  %41 = vmatpush1.msra.mxu0 %v21
  %42 = vmatprep.subr.mxu0 0.0
  %43 = vmatpush1.msra.mxu0 %v22
  %44 = vmatprep.subr.mxu0 0.0
  %45 = vmatpush1.msra.mxu0 %v23
  %46 = vmatprep.subr.mxu0 0.0
  %47 = vmatpush1.msra.mxu0 %v24
  %48 = vmatprep.subr.mxu0 0.0
  %49 = vmatpush1.msra.mxu0 %v25
  %50 = vmatprep.subr.mxu0 0.0
  %51 = vmatpush1.msra.mxu0 %v26
  %52 = vmatprep.subr.mxu0 0.0
  %53 = vmatpush1.msra.mxu0 %v27
  %54 = vmatprep.subr.mxu0 0.0
  %55 = vmatpush1.msra.mxu0 %v28
  %56 = vmatprep.subr.mxu0 0.0
  %57 = vmatpush1.msra.mxu0 %v29
  %58 = vmatprep.subr.mxu0 0.0
  %59 = vmatpush1.msra.mxu0 %v30
  %60 = vmatprep.subr.mxu0 0.0
  %61 = vmatpush1.msra.mxu0 %v31
  %62 = vmatprep.subr.mxu0 0.0
  %63 = vmatpush1.msra.mxu0 %v32
  %64 = vmatprep.subr.mxu0 0.0
  %65 = vmatpush1.msra.mxu0 %v33
  %66 = vmatprep.subr.mxu0 0.0
  %67 = vmatpush1.msra.mxu0 0.0
  %68 = vmatprep.subr.mxu0 0.0
  %69 = vmatpush1.msra.mxu0 0.0
  %70 = vmatprep.subr.mxu0 0.0
  %71 = vmatpush1.msra.mxu0 0.0
  %72 = vmatprep.subr.mxu0 0.0
  %73 = vmatpush1.msra.mxu0 0.0
  %74 = vmatprep.subr.mxu0 0.0
  %75 = vmatpush1.msra.mxu0 0.0
  %76 = vmatprep.subr.mxu0 0.0
  %77 = vmatpush1.msra.mxu0 0.0
  %78 = vmatprep.subr.mxu0 0.0
  %79 = vmatpush1.msra.mxu0 0.0
  %80 = vmatprep.subr.mxu0 0.0
  %81 = vmatpush1.msra.mxu0 0.0
  %82 = vmatprep.subr.mxu0 0.0
  %83 = vmatpush1.msra.mxu0 0.0
  %84 = vmatprep.subr.mxu0 0.0
  %85 = vmatpush1.msra.mxu0 0.0
  %86 = vmatprep.subr.mxu0 0.0
  %87 = vmatpush1.msra.mxu0 0.0
  %88 = vmatprep.subr.mxu0 0.0
  %89 = vmatpush1.msra.mxu0 0.0
  %90 = vmatprep.subr.mxu0 0.0
  %91 = vmatpush1.msra.mxu0 0.0
  %92 = vmatprep.subr.mxu0 0.0
  %93 = vmatpush1.msra.mxu0 0.0
  %94 = vmatprep.subr.mxu0 0.0
  %95 = vmatpush1.msra.mxu0 0.0
  %96 = vmatprep.subr.mxu0 0.0
  %97 = vmatpush1.msra.mxu0 0.0
  %98 = vmatprep.mubr.f32.mxu0 0.0
  %99 = vmatmul.mubr.f32.gmra.mrb[0].mxu0 %v17
  %v100 = vpop.f32.mrb[0].mxu0
  %v101 = vadd.f32 0.0, %v100
  %v102 = vpop.f32.mrb[0].mxu0
  %103 = vdwg.mxu0
  %v104 = vmax.f32 %v101, 0.0
  %v105 = vld [vmem:[%s3] sm:$0x1]
  %v106 = vld [vmem:[%s2] sm:$0xff]
  %v107 = vld [vmem:[%s2 + $0x8] sm:$0xff]
  %v108 = vld [vmem:[%s2 + $0x10] sm:$0xff]
  %v109 = vld [vmem:[%s2 + $0x18] sm:$0xff]
  %v110 = vld [vmem:[%s2 + $0x20] sm:$0xff]
  %v111 = vld [vmem:[%s2 + $0x28] sm:$0xff]
  %v112 = vld [vmem:[%s2 + $0x30] sm:$0xff]
  %v113 = vld [vmem:[%s2 + $0x38] sm:$0xff]
  %v114 = vld [vmem:[%s2 + $0x40] sm:$0xff]
  %v115 = vld [vmem:[%s2 + $0x48] sm:$0xff]
  %v116 = vld [vmem:[%s2 + $0x50] sm:$0xff]
  %v117 = vld [vmem:[%s2 + $0x58] sm:$0xff]
  %v118 = vlaneseq
  %v119 = vshrl.u32 %v118, 7
  %v120 = vsub.s32 0, %v119
  %v121 = vrot.slane %v105, %v120
  %vm122 = vcmask 785408
  %v124 = vsel %vm122, %v104, 0
  %126 = vmatprep.subr.mxu0 0.0
  %127 = vmatpush1.msra.mxu0 %v106
  %128 = vmatprep.subr.mxu0 0.0
  %129 = vmatpush1.msra.mxu0 %v107
  %130 = vmatprep.subr.mxu0 0.0
  %131 = vmatpush1.msra.mxu0 %v108
  %132 = vmatprep.subr.mxu0 0.0
  %133 = vmatpush1.msra.mxu0 %v109
  %134 = vmatprep.subr.mxu0 0.0
  %135 = vmatpush1.msra.mxu0 %v110
  %136 = vmatprep.subr.mxu0 0.0
  %137 = vmatpush1.msra.mxu0 %v111
  %138 = vmatprep.subr.mxu0 0.0
  %139 = vmatpush1.msra.mxu0 %v112
  %140 = vmatprep.subr.mxu0 0.0
  %141 = vmatpush1.msra.mxu0 %v113
  %142 = vmatprep.subr.mxu0 0.0
  %143 = vmatpush1.msra.mxu0 %v114
  %144 = vmatprep.subr.mxu0 0.0
  %145 = vmatpush1.msra.mxu0 %v115
  %146 = vmatprep.subr.mxu0 0.0
  %147 = vmatpush1.msra.mxu0 %v116
  %148 = vmatprep.subr.mxu0 0.0
  %149 = vmatpush1.msra.mxu0 %v117
  %150 = vmatprep.subr.mxu0 0.0
  %151 = vmatpush1.msra.mxu0 0.0
  %152 = vmatprep.subr.mxu0 0.0
  %153 = vmatpush1.msra.mxu0 0.0
  %154 = vmatprep.subr.mxu0 0.0
  %155 = vmatpush1.msra.mxu0 0.0
  %156 = vmatprep.subr.mxu0 0.0
  %157 = vmatpush1.msra.mxu0 0.0
  %158 = vmatprep.subr.mxu0 0.0
  %159 = vmatpush1.msra.mxu0 0.0
  %160 = vmatprep.subr.mxu0 0.0
  %161 = vmatpush1.msra.mxu0 0.0
  %162 = vmatprep.subr.mxu0 0.0
  %163 = vmatpush1.msra.mxu0 0.0
  %164 = vmatprep.subr.mxu0 0.0
  %165 = vmatpush1.msra.mxu0 0.0
  %166 = vmatprep.subr.mxu0 0.0
  %167 = vmatpush1.msra.mxu0 0.0
  %168 = vmatprep.subr.mxu0 0.0
  %169 = vmatpush1.msra.mxu0 0.0
  %170 = vmatprep.subr.mxu0 0.0
  %171 = vmatpush1.msra.mxu0 0.0
  %172 = vmatprep.subr.mxu0 0.0
  %173 = vmatpush1.msra.mxu0 0.0
  %174 = vmatprep.subr.mxu0 0.0
  %175 = vmatpush1.msra.mxu0 0.0
  %176 = vmatprep.subr.mxu0 0.0
  %177 = vmatpush1.msra.mxu0 0.0
  %178 = vmatprep.subr.mxu0 0.0
  %179 = vmatpush1.msra.mxu0 0.0
  %180 = vmatprep.subr.mxu0 0.0
  %181 = vmatpush1.msra.mxu0 0.0
  %182 = vmatprep.subr.mxu0 0.0
  %183 = vmatpush1.msra.mxu0 0.0
  %184 = vmatprep.subr.mxu0 0.0
  %185 = vmatpush1.msra.mxu0 0.0
  %186 = vmatprep.subr.mxu0 0.0
  %187 = vmatpush1.msra.mxu0 0.0
  %188 = vmatprep.subr.mxu0 0.0
  %189 = vmatpush1.msra.mxu0 0.0
  %190 = vmatprep.mubr.f32.mxu0 0.0
  %191 = vmatmul.mubr.f32.gmra.mrb[0].mxu0 %v124
  %v192 = vpop.f32.mrb[0].mxu0
  %v193 = vadd.f32 %v121, %v192
  %v194 = vpop.f32.mrb[0].mxu0
  %195 = vdwg.mxu0
  %v196 = vmax.f32 %v193, 0.0
  %v197 = vld [vmem:[%s3 + $0x1] sm:$0x1]
  %v198 = vld [vmem:[%s3 + $0x2] sm:$0x1]
  %v199 = vlaneseq
  %v200 = vshrl.u32 %v199, 7
  %v201 = vsub.s32 0, %v200
  %v202 = vrot.slane %v197, %v201
  %v203 = vmul.f32 %v196, %v202
  %vm204 = vcmask 261120
  %v205 = vsel %vm204, %v203, 0.0
  %206 = vadd.xlane.f32.xlu0 %v205
  %v207 = vpop.xlane.xlu0 %206
  %v208 = vlaneseq
  %v209 = vshrl.u32 %v208, 7
  %v210 = vsub.s32 0, %v209
  %v211 = vrot.slane %v198, %v210
  %v212 = vadd.f32 %v207, %v211
  %vm213 = vcmask 7168
  %214 = vst.msk [vmem:[%s4] sm:$0xff] %vm213, %v212
  // Predicated region
  $region18: #{tpu_custom_call.1} parent=0 // pred_check
    _
  $region19: #{tpu_custom_call.1} parent=0 // pred_check_branch
    %216 = sbr.rel (0) target = $region21
  $region20: #{tpu_custom_call.1} parent=0 // pred_region
    _
  $region21: #{tpu_custom_call.1} parent=0 // pred_fallthru
    _
  // Predicated region
  $region22: #{tpu_custom_call.1} parent=0 // pred_check
    _
  $region23: #{tpu_custom_call.1} parent=0 // pred_check_branch
    %218 = sbr.rel (0) target = $region25
  $region24: #{tpu_custom_call.1} parent=0 // pred_region
    _
  $region25: #{tpu_custom_call.1} parent=0 // pred_fallthru
    _

</llo_original>
